<compile_context>
chip_gen: v7x
topology: tpu7x:2x2x1
jax: 0.10.0
libtpu: 0.0.40
codegen_flags: <defaults>
</compile_context>

<pallas_src>
import numpy as np
import jax
import jax.numpy as jnp
from jax.experimental import pallas as pl
from jax.experimental.pallas import tpu as pltpu


def _round_up(x, m):
    return ((x + m - 1) // m) * m


def modelx_forward_all_nodes(x, adj_int8, params, *, tile_i=128):
    """mlp_out(GATv2Conv(x, adj)) for all N nodes (row mask applied by caller).

    x        : [N, Cin] float32 node features
    adj_int8 : [N, N]   int8 adjacency, adj[i, j] = 1 iff edge j -> i
    params   : wl/bl, wr/br (GATv2 lin_l / lin_r, weights stored [Cin, C]),
               att [1, C], bg [1, C], wo [C, Dout], bo [1, Dout]
    """
    N, Cin = x.shape
    C = params["wl"].shape[1]          # GATv2 out_channels (= in_dim)
    Dout = params["wo"].shape[1]

    Cp = 128                           # lane-padded channel width (MXU / lane dense)
    Dp = 128                           # lane-padded output width (lane-dense stores)
    C8 = max(8, _round_up(C, 8))       # sublane-padded count of *true* channels
    TI = tile_i                        # destination-row tile; multiple of 8.
    # TODO(synk): on v7x with very large N, re-derive TI for the 64 MiB VMEM budget.
    Np = _round_up(max(N, TI), TI)

    f32 = jnp.float32

    # ---------- zero-padded operands (zero padding preserves the math) ----------
    x_p = jnp.zeros((Np, Cp), f32).at[:N, :Cin].set(x)
    xT_p = x_p.T                                         # layout glue for xl^T matmul
    adj_p = jnp.zeros((Np, Np), jnp.int8).at[:N, :N].set(adj_int8)

    wl_p = jnp.zeros((Cp, Cp), f32).at[:Cin, :C].set(params["wl"])
    wr_p = jnp.zeros((Cp, Cp), f32).at[:Cin, :C].set(params["wr"])
    wlr = jnp.concatenate([wl_p, wr_p], axis=1)          # [Cp, 2Cp] fused projection
    blr = (jnp.zeros((1, 2 * Cp), f32)
           .at[0, :C].set(params["bl"][0])
           .at[0, Cp:Cp + C].set(params["br"][0]))
    wlT = jnp.zeros((C8, Cp), f32).at[:C, :Cin].set(params["wl"].T)
    blT = jnp.zeros((C8, 1), f32).at[:C, 0].set(params["bl"][0])
    att = jnp.zeros((C8,), f32).at[:C].set(params["att"][0])          # SMEM scalars
    bg = jnp.zeros((1, Cp), f32).at[0, :C].set(params["bg"][0])
    wo = jnp.zeros((Cp, Dp), f32).at[:C, :Dout].set(params["wo"]).astype(jnp.bfloat16)
    bo = jnp.zeros((1, Dp), f32).at[0, :Dout].set(params["bo"][0])

    vmem = pl.BlockSpec(memory_space=pltpu.MemorySpace.VMEM)

    # ---------------- kernel 1: fused GATv2 projections (one-time) ----------------
    def proj_kernel(x_ref, xT_ref, wlr_ref, blr_ref, wlT_ref, blT_ref,
                    xl_bf_ref, xlT_ref, xr_ref):
        # single fused MXU push for lin_l | lin_r
        xlr = jnp.dot(x_ref[...], wlr_ref[...],
                      preferred_element_type=jnp.float32) + blr_ref[...]
        xl_bf_ref[...] = xlr[:, :Cp].astype(jnp.bfloat16)        # aggregation operand
        xr_ref[...] = xlr[:, Cp:]                                # lane-dense [Np, Cp]
        # xl transposed ([C8, Np], lane = source node) for the channel-loop logits
        xlT_ref[...] = jnp.dot(wlT_ref[...], xT_ref[...],
                               preferred_element_type=jnp.float32) + blT_ref[...]

    xl_bf, xlT, xr = pl.pallas_call(
        proj_kernel,
        out_shape=(jax.ShapeDtypeStruct((Np, Cp), jnp.bfloat16),
                   jax.ShapeDtypeStruct((C8, Np), jnp.float32),
                   jax.ShapeDtypeStruct((Np, Cp), jnp.float32)),
        in_specs=[vmem] * 6,
        out_specs=(vmem, vmem, vmem),
    )(x_p, xT_p, wlr, blr, wlT, blT)

    # ------------- kernel 2: tiled attention + aggregation + output MLP -------------
    def attn_kernel(adj_ref, xr_ref, xlT_ref, xl_ref, att_ref, bg_ref, wo_ref, bo_ref,
                    o_ref):
        # adjacency streamed as int8; build the edge mask once, reuse twice
        edge = adj_ref[...].astype(jnp.float32) > 0.0            # [TI, Np]
        xr_t = xr_ref[...]                                       # [TI, Cp] f32

        # attention logits: e[i, j] = sum_c att[c] * leaky_relu(xl[j,c] + xr[i,c])
        # accumulated on lane-dense [TI, Np] slabs -- no [TI, Np, C] cube.
        e = jnp.zeros((TI, Np), jnp.float32)
        for c in range(C):                                       # static, C is small
            z = xlT_ref[c:c + 1, :] + xr_t[:, c:c + 1]           # [TI, Np]
            z = jnp.where(z > 0, z, jnp.float32(0.2) * z)        # leaky_relu(0.2)
            e = e + att_ref[c] * z                               # att scalar from SMEM

        # masked softmax over source nodes j
        e = jnp.where(edge, e, jnp.float32(-1e30))
        m = jnp.max(e, axis=-1, keepdims=True)
        p = jnp.where(edge, jnp.exp(e - m), jnp.float32(0.0))
        denom = jnp.sum(p, axis=-1, keepdims=True)
        inv = pl.reciprocal(jnp.maximum(denom, jnp.float32(1e-20)), approx=True)
        alpha = (p * inv).astype(jnp.bfloat16)

        # aggregate messages (message = lin_l(x_j)) + GAT bias, then output MLP
        h = jnp.dot(alpha, xl_ref[...],
                    preferred_element_type=jnp.float32) + bg_ref[...]
        o_ref[...] = jnp.dot(h.astype(jnp.bfloat16), wo_ref[...],
                             preferred_element_type=jnp.float32) + bo_ref[...]

    out_p = pl.pallas_call(
        attn_kernel,
        out_shape=jax.ShapeDtypeStruct((Np, Dp), jnp.float32),
        grid_spec=pltpu.PrefetchScalarGridSpec(
            num_scalar_prefetch=0,
            grid=(Np // TI,),
            in_specs=[
                pl.BlockSpec((TI, Np), lambda i: (i, 0)),               # adj tile (int8)
                pl.BlockSpec((TI, Cp), lambda i: (i, 0)),               # xr rows of tile
                pl.BlockSpec((C8, Np), lambda i: (0, 0)),               # xl^T (resident)
                pl.BlockSpec((Np, Cp), lambda i: (0, 0)),               # xl bf16 (resident)
                pl.BlockSpec(memory_space=pltpu.MemorySpace.SMEM),      # att scalars
                pl.BlockSpec((1, Cp), lambda i: (0, 0)),                # bg
                pl.BlockSpec((Cp, Dp), lambda i: (0, 0)),               # wo (bf16)
                pl.BlockSpec((1, Dp), lambda i: (0, 0)),                # bo
            ],
            out_specs=pl.BlockSpec((TI, Dp), lambda i: (i, 0)),
        ),
        compiler_params=pltpu.CompilerParams(
            dimension_semantics=("parallel",),          # shard dst tiles on v7x 2 TCs
            vmem_limit_bytes=32 * 1024 * 1024,          # explicit; safe on v5e/v6e/v7x
        ),
    )(adj_p, xr, xlT, xl_bf, att, bg, wo, bo)

    return out_p[:N, :Dout]


def reference_forward_all_nodes(x, adj, params):
    """Pure-numpy f32 reference of the same math (GATv2Conv semantics)."""
    x = np.asarray(x, np.float32)
    adj = np.asarray(adj, np.float32)
    xl = x @ np.asarray(params["wl"]) + np.asarray(params["bl"])
    xr = x @ np.asarray(params["wr"]) + np.asarray(params["br"])
    s = xl[None, :, :] + xr[:, None, :]
    s = np.where(s > 0, s, 0.2 * s)
    e = np.sum(s * np.asarray(params["att"])[None, :, :], axis=-1)
    e = np.where(adj > 0, e, -1e30)
    m = e.max(axis=-1, keepdims=True)
    p = np.exp(e - m) * adj
    denom = np.maximum(p.sum(axis=-1, keepdims=True), 1e-20)
    alpha = p / denom
    h = alpha @ xl + np.asarray(params["bg"])
    return h @ np.asarray(params["wo"]) + np.asarray(params["bo"])


if __name__ == "__main__":
    # small synthetic shapes consistent with the module
    N, IN_DIM, DIM_OUT = 16, 8, 4

    key = jax.random.PRNGKey(0)
    ks = jax.random.split(key, 10)

    # node features
    x = jax.random.normal(ks[0], (N, IN_DIM), dtype=jnp.float32)

    # deterministic edge_index [2, E]: node i receives edges from i-1, i+1, i+5 (mod N)
    src = np.concatenate([(np.arange(N) - 1) % N,
                          (np.arange(N) + 1) % N,
                          (np.arange(N) + 5) % N])
    dst = np.concatenate([np.arange(N)] * 3)
    edge_index = np.stack([src, dst], axis=0).astype(np.int32)     # [2, 48]

    # dense adjacency glue: adj[dst, src] = 1 (int8 to shrink HBM->VMEM traffic)
    adj_np = np.zeros((N, N), dtype=np.int8)
    adj_np[edge_index[1], edge_index[0]] = 1
    adj = jnp.asarray(adj_np)

    # boolean node mask (data.mask): keep every other node (static host-side gather)
    mask_np = (np.arange(N) % 2 == 0)
    mask_idx = np.nonzero(mask_np)[0]

    # deterministic parameter init; weights stored transposed for x @ W
    def glorot(k, fan_in, fan_out):
        lim = np.sqrt(6.0 / (fan_in + fan_out)).astype(np.float32)
        return jax.random.uniform(k, (fan_in, fan_out), jnp.float32, -lim, lim)

    params = {
        "wl":  glorot(ks[1], IN_DIM, IN_DIM),                       # GATv2 lin_l
        "bl":  0.01 * jax.random.normal(ks[6], (1, IN_DIM), jnp.float32),
        "wr":  glorot(ks[2], IN_DIM, IN_DIM),                       # GATv2 lin_r
        "br":  0.01 * jax.random.normal(ks[7], (1, IN_DIM), jnp.float32),
        "att": glorot(ks[3], 1, IN_DIM),                            # attention vector
        "bg":  0.01 * jax.random.normal(ks[8], (1, IN_DIM), jnp.float32),
        "wo":  glorot(ks[4], IN_DIM, DIM_OUT),                      # mlp_out weight
        "bo":  0.01 * jax.random.normal(ks[5], (1, DIM_OUT), jnp.float32),
    }

    # run the fused kernels for all nodes, then apply the row mask (glue gather)
    h_full = modelx_forward_all_nodes(x, adj, params)
    h_full = jax.block_until_ready(h_full)
    h_masked = np.asarray(h_full)[mask_idx]                         # == mlp_out(gnn(x)[mask])

    # validate against a pure-numpy f32 reference (bf16 matmul operands + approx
    # reciprocal in the kernel => loosened tolerance)
    ref_full = reference_forward_all_nodes(x, adj, params)
    np.testing.assert_allclose(np.asarray(h_full), ref_full, rtol=3e-2, atol=3e-2)
    assert h_masked.shape == (mask_idx.shape[0], DIM_OUT)

    print("KERNEL_OK")
</pallas_src>

<mosaic_0001>
module attributes {stable_mosaic.version = 11 : i64} {
  func.func @proj_kernel(%arg0: memref<128x128xf32, #tpu.memory_space<vmem>>, %arg1: memref<128x128xf32, #tpu.memory_space<vmem>>, %arg2: memref<128x256xf32, #tpu.memory_space<vmem>>, %arg3: memref<1x256xf32, #tpu.memory_space<vmem>>, %arg4: memref<8x128xf32, #tpu.memory_space<vmem>>, %arg5: memref<8x1xf32, #tpu.memory_space<vmem>>, %arg6: memref<128x128xbf16, #tpu.memory_space<vmem>>, %arg7: memref<8x128xf32, #tpu.memory_space<vmem>>, %arg8: memref<128x128xf32, #tpu.memory_space<vmem>>) attributes {dimension_semantics = [], scalar_prefetch = 0 : i64, scratch_operands = 0 : i64, tpu.core_type = #tpu.core_type<tc>} {
    %c0 = arith.constant 0 : index
    %c0_0 = arith.constant 0 : index
    %0 = vector.load %arg0[%c0, %c0_0] : memref<128x128xf32, #tpu.memory_space<vmem>>, vector<128x128xf32>
    %c0_1 = arith.constant 0 : index
    %c0_2 = arith.constant 0 : index
    %1 = vector.load %arg2[%c0_1, %c0_2] : memref<128x256xf32, #tpu.memory_space<vmem>>, vector<128x256xf32>
    %cst = arith.constant dense<0.000000e+00> : vector<128x256xf32>
    %2 = tpu.matmul %0, %1, %cst {dimension_numbers = #tpu.dot_dimension_numbers<[1], [0], [0], [1], [0, 0, 1, 1], [], []>} : vector<128x128xf32>, vector<128x256xf32>, vector<128x256xf32> -> vector<128x256xf32>
    %c0_3 = arith.constant 0 : index
    %c0_4 = arith.constant 0 : index
    %3 = vector.load %arg3[%c0_3, %c0_4] : memref<1x256xf32, #tpu.memory_space<vmem>>, vector<1x256xf32>
    %4 = vector.broadcast %3 : vector<1x256xf32> to vector<128x256xf32>
    %5 = arith.addf %2, %4 : vector<128x256xf32>
    %6 = vector.extract_strided_slice %5 {offsets = [0, 0], sizes = [128, 128], strides = [1, 1]} : vector<128x256xf32> to vector<128x128xf32>
    %7 = arith.truncf %6 : vector<128x128xf32> to vector<128x128xbf16>
    %c0_5 = arith.constant 0 : index
    %c0_6 = arith.constant 0 : index
    %8 = vector.load %arg6[%c0_5, %c0_6] : memref<128x128xbf16, #tpu.memory_space<vmem>>, vector<128x128xbf16>
    tpu.vector_store %arg6[%c0_5, %c0_6], %7 {strides = array<i32>} : memref<128x128xbf16, #tpu.memory_space<vmem>>, vector<128x128xbf16>,
    %9 = vector.extract_strided_slice %5 {offsets = [0, 128], sizes = [128, 128], strides = [1, 1]} : vector<128x256xf32> to vector<128x128xf32>
    %c0_7 = arith.constant 0 : index
    %c0_8 = arith.constant 0 : index
    %10 = vector.load %arg8[%c0_7, %c0_8] : memref<128x128xf32, #tpu.memory_space<vmem>>, vector<128x128xf32>
    tpu.vector_store %arg8[%c0_7, %c0_8], %9 {strides = array<i32>} : memref<128x128xf32, #tpu.memory_space<vmem>>, vector<128x128xf32>,
    %c0_9 = arith.constant 0 : index
    %c0_10 = arith.constant 0 : index
    %11 = vector.load %arg4[%c0_9, %c0_10] : memref<8x128xf32, #tpu.memory_space<vmem>>, vector<8x128xf32>
    %c0_11 = arith.constant 0 : index
    %c0_12 = arith.constant 0 : index
    %12 = vector.load %arg1[%c0_11, %c0_12] : memref<128x128xf32, #tpu.memory_space<vmem>>, vector<128x128xf32>
    %cst_13 = arith.constant dense<0.000000e+00> : vector<8x128xf32>
    %13 = tpu.matmul %11, %12, %cst_13 {dimension_numbers = #tpu.dot_dimension_numbers<[1], [0], [0], [1], [0, 0, 1, 1], [], []>} : vector<8x128xf32>, vector<128x128xf32>, vector<8x128xf32> -> vector<8x128xf32>
    %c0_14 = arith.constant 0 : index
    %c0_15 = arith.constant 0 : index
    %14 = vector.load %arg5[%c0_14, %c0_15] : memref<8x1xf32, #tpu.memory_space<vmem>>, vector<8x1xf32>
    %15 = vector.broadcast %14 : vector<8x1xf32> to vector<8x128xf32>
    %16 = arith.addf %13, %15 : vector<8x128xf32>
    %c0_16 = arith.constant 0 : index
    %c0_17 = arith.constant 0 : index
    %17 = vector.load %arg7[%c0_16, %c0_17] : memref<8x128xf32, #tpu.memory_space<vmem>>, vector<8x128xf32>
    tpu.vector_store %arg7[%c0_16, %c0_17], %16 {strides = array<i32>} : memref<8x128xf32, #tpu.memory_space<vmem>>, vector<8x128xf32>,
    return
  }
}

</mosaic_0001>

<llo_original>
// kernel: tpu_custom_call.1
$region0: #{tpu_custom_call.1}
  #allocation0 [shape = 'u32[]', space=smem, size = 0x4, offset = 0x4, fixed_abs, tag = 'smem constant byte address 0x4 - core index']
  #allocation1 [shape = 'u32[144,128]{1,0:T(1,128)}', space=vmem, size = 0x12000, scoped, tag = 'internal scratch']
  %s0 = inlined_call_operand.hbm [shape: f32[128,128], index: 0, kind: input, shape index: {}]
  %s1 = inlined_call_operand.hbm [shape: f32[128,128], index: 1, kind: input, shape index: {}]
  %s2 = inlined_call_operand.hbm [shape: f32[128,256], index: 2, kind: input, shape index: {}]
  %s3 = inlined_call_operand.vmem [shape: f32[1,256], index: 3, kind: input, shape index: {}]
  %s4 = inlined_call_operand.vmem [shape: f32[8,128], index: 4, kind: input, shape index: {}]
  %s5 = inlined_call_operand.vmem [shape: f32[8,1], index: 5, kind: input, shape index: {}]
  %s6 = inlined_call_operand.hbm [shape: bf16[128,128], index: 6, kind: output, shape index: {0}]
  %s7 = inlined_call_operand.hbm [shape: f32[8,128], index: 7, kind: output, shape index: {1}]
  %s8 = inlined_call_operand.hbm [shape: f32[128,128], index: 8, kind: output, shape index: {2}]
  %9 = xla_tuple %s6, %s7, %s8
  %s10 = sld [smem:[#allocation0]]
  $region62: #{tpu_custom_call.1} parent=0
    _
  %s12 = ssub.s32 1, %s10
  %s13 = scalar_select 0, %s12, %s10
  $region1: #{tpu_custom_call.1} parent=0
    #allocation2 [shape = 'u8[65536]{0}', space=vmem, size = 0x10000, scoped, tag = 'input window, operand 0, single buffered']
    #allocation3 [shape = 's32[1]{0}', space=sflag, size = 0x4, scoped, tag = 'scoped memory for tpu_custom_call.1']
    #allocation4 [shape = 's32[1]{0}', space=sflag, size = 0x4, scoped, tag = 'scoped memory for tpu_custom_call.1']
    #allocation5 [shape = 'u8[65536]{0}', space=vmem, size = 0x10000, scoped, tag = 'input window, operand 1, single buffered']
    #allocation6 [shape = 's32[1]{0}', space=sflag, size = 0x4, scoped, tag = 'scoped memory for tpu_custom_call.1']
    #allocation7 [shape = 'u8[131072]{0}', space=vmem, size = 0x20000, scoped, tag = 'input window, operand 2, single buffered']
    #allocation8 [shape = 'u8[32768]{0}', space=vmem, size = 0x8000, scoped, tag = 'output window, operand 0, single buffered']
    #allocation9 [shape = 'u8[4096]{0}', space=vmem, size = 0x1000, scoped, tag = 'output window, operand 1, single buffered']
    #allocation10 [shape = 's32[1]{0}', space=sflag, size = 0x4, scoped, tag = 'scoped memory for tpu_custom_call.1']
    #allocation11 [shape = 'u8[65536]{0}', space=vmem, size = 0x10000, scoped, tag = 'output window, operand 2, single buffered']
    %14 = vsyncpa [#allocation3], 0
    %15 = vsyncpa [#allocation6], 0
    %16 = vsyncpa [#allocation4], 0
    %17 = vsyncpa [#allocation10], 0
    // Predicated region
    $region2: #{tpu_custom_call.1} parent=1 // pred_check
      _
    $region3: #{tpu_custom_call.1} parent=1 // pred_check_branch
      %19 = sbr.rel (0) target = $region5
    $region4: #{tpu_custom_call.1} parent=1 // pred_region
      %s21 = ssub.s32 2048, 2048
      %22 = vsyncadd [#allocation3], %s21
      %s23 = sshll.u32 [#allocation2], 4
      %s24 = int_to_ptr.vmem [resolvable:$true] %s23
      %29 = dma.hbm_to_vmem [thread:$0]  %s0, 2048, %s24, [#allocation3], 128, 128, 8
    $region5: #{tpu_custom_call.1} parent=1 // pred_fallthru
      _
    // Predicated region
    $region6: #{tpu_custom_call.1} parent=1 // pred_check
      _
    $region7: #{tpu_custom_call.1} parent=1 // pred_check_branch
      %31 = sbr.rel (0) target = $region9
    $region8: #{tpu_custom_call.1} parent=1 // pred_region
      %s33 = ssub.s32 2048, 2048
      %34 = vsyncadd [#allocation6], %s33
      %s35 = sshll.u32 [#allocation5], 4
      %s36 = int_to_ptr.vmem [resolvable:$true] %s35
      %41 = dma.hbm_to_vmem [thread:$0]  %s1, 2048, %s36, [#allocation6], 128, 128, 8
    $region9: #{tpu_custom_call.1} parent=1 // pred_fallthru
      _
    // Predicated region
    $region10: #{tpu_custom_call.1} parent=1 // pred_check
      _
    $region11: #{tpu_custom_call.1} parent=1 // pred_check_branch
      %43 = sbr.rel (0) target = $region13
    $region12: #{tpu_custom_call.1} parent=1 // pred_region
      %s45 = ssub.s32 4096, 4096
      %46 = vsyncadd [#allocation6], %s45
      %s47 = sshll.u32 [#allocation7], 4
      %s48 = int_to_ptr.vmem [resolvable:$true] %s47
      %53 = dma.hbm_to_vmem [thread:$0]  %s2, 4096, %s48, [#allocation6], 256, 256, 16
    $region13: #{tpu_custom_call.1} parent=1 // pred_fallthru
      _
    // Predicated region
    $region14: #{tpu_custom_call.1} parent=1 // pred_check
      _
    $region15: #{tpu_custom_call.1} parent=1 // pred_check_branch
      %55 = sbr.rel (0) target = $region17
    $region16: #{tpu_custom_call.1} parent=1 // pred_region
      _
    $region17: #{tpu_custom_call.1} parent=1 // pred_fallthru
      _
    // Predicated region
    $region18: #{tpu_custom_call.1} parent=1 // pred_check
      _
    $region19: #{tpu_custom_call.1} parent=1 // pred_check_branch
      %57 = sbr.rel (0) target = $region21
    $region20: #{tpu_custom_call.1} parent=1 // pred_region
      _
    $region21: #{tpu_custom_call.1} parent=1 // pred_fallthru
      _
    // Predicated region
    $region22: #{tpu_custom_call.1} parent=1 // pred_check
      _
    $region23: #{tpu_custom_call.1} parent=1 // pred_check_branch
      %59 = sbr.rel (0) target = $region25
    $region24: #{tpu_custom_call.1} parent=1 // pred_region
      _
    $region25: #{tpu_custom_call.1} parent=1 // pred_fallthru
      _
    // Predicated region
    $region26: #{tpu_custom_call.1} parent=1 // pred_check
      _
    $region27: #{tpu_custom_call.1} parent=1 // pred_check_branch
      %61 = sbr.rel (0) target = $region29
    $region28: #{tpu_custom_call.1} parent=1 // pred_region
      %62 = dma.done [#allocation3], 2048
    $region29: #{tpu_custom_call.1} parent=1 // pred_fallthru
      _
    // Predicated region
    $region30: #{tpu_custom_call.1} parent=1 // pred_check
      _
    $region31: #{tpu_custom_call.1} parent=1 // pred_check_branch
      %64 = sbr.rel (0) target = $region33
    $region32: #{tpu_custom_call.1} parent=1 // pred_region
      %65 = dma.done [#allocation6], 2048
    $region33: #{tpu_custom_call.1} parent=1 // pred_fallthru
      _
    // Predicated region
    $region34: #{tpu_custom_call.1} parent=1 // pred_check
      _
    $region35: #{tpu_custom_call.1} parent=1 // pred_check_branch
      %67 = sbr.rel (0) target = $region37
    $region36: #{tpu_custom_call.1} parent=1 // pred_region
      %68 = dma.done [#allocation6], 4096
    $region37: #{tpu_custom_call.1} parent=1 // pred_fallthru
      _
    %v69 = vld [vmem:[#allocation2] sm:$0xff]
    %v70 = vld [vmem:[#allocation2 + $0x8] sm:$0xff]
    %v71 = vld [vmem:[#allocation2 + $0x10] sm:$0xff]
    %v72 = vld [vmem:[#allocation2 + $0x18] sm:$0xff]
    %v73 = vld [vmem:[#allocation2 + $0x20] sm:$0xff]
    %v74 = vld [vmem:[#allocation2 + $0x28] sm:$0xff]
    %v75 = vld [vmem:[#allocation2 + $0x30] sm:$0xff]
    %v76 = vld [vmem:[#allocation2 + $0x38] sm:$0xff]
    %v77 = vld [vmem:[#allocation2 + $0x40] sm:$0xff]
    %v78 = vld [vmem:[#allocation2 + $0x48] sm:$0xff]
    %v79 = vld [vmem:[#allocation2 + $0x50] sm:$0xff]
    %v80 = vld [vmem:[#allocation2 + $0x58] sm:$0xff]
    %v81 = vld [vmem:[#allocation2 + $0x60] sm:$0xff]
    %v82 = vld [vmem:[#allocation2 + $0x68] sm:$0xff]
    %v83 = vld [vmem:[#allocation2 + $0x70] sm:$0xff]
    %v84 = vld [vmem:[#allocation2 + $0x78] sm:$0xff]
    %v85 = vld [vmem:[#allocation7] sm:$0xff]
    %v86 = vld [vmem:[#allocation7 + $0x8] sm:$0xff]
    %v87 = vld [vmem:[#allocation7 + $0x10] sm:$0xff]
    %v88 = vld [vmem:[#allocation7 + $0x18] sm:$0xff]
    %v89 = vld [vmem:[#allocation7 + $0x20] sm:$0xff]
    %v90 = vld [vmem:[#allocation7 + $0x28] sm:$0xff]
    %v91 = vld [vmem:[#allocation7 + $0x30] sm:$0xff]
    %v92 = vld [vmem:[#allocation7 + $0x38] sm:$0xff]
    %v93 = vld [vmem:[#allocation7 + $0x40] sm:$0xff]
    %v94 = vld [vmem:[#allocation7 + $0x48] sm:$0xff]
    %v95 = vld [vmem:[#allocation7 + $0x50] sm:$0xff]
    %v96 = vld [vmem:[#allocation7 + $0x58] sm:$0xff]
    %v97 = vld [vmem:[#allocation7 + $0x60] sm:$0xff]
    %v98 = vld [vmem:[#allocation7 + $0x68] sm:$0xff]
    %v99 = vld [vmem:[#allocation7 + $0x70] sm:$0xff]
    %v100 = vld [vmem:[#allocation7 + $0x78] sm:$0xff]
    %v101 = vld [vmem:[#allocation7 + $0x80] sm:$0xff]
    %v102 = vld [vmem:[#allocation7 + $0x88] sm:$0xff]
    %v103 = vld [vmem:[#allocation7 + $0x90] sm:$0xff]
    %v104 = vld [vmem:[#allocation7 + $0x98] sm:$0xff]
    %v105 = vld [vmem:[#allocation7 + $0xa0] sm:$0xff]
    %v106 = vld [vmem:[#allocation7 + $0xa8] sm:$0xff]
    %v107 = vld [vmem:[#allocation7 + $0xb0] sm:$0xff]
    %v108 = vld [vmem:[#allocation7 + $0xb8] sm:$0xff]
    %v109 = vld [vmem:[#allocation7 + $0xc0] sm:$0xff]
    %v110 = vld [vmem:[#allocation7 + $0xc8] sm:$0xff]
    %v111 = vld [vmem:[#allocation7 + $0xd0] sm:$0xff]
    %v112 = vld [vmem:[#allocation7 + $0xd8] sm:$0xff]
    %v113 = vld [vmem:[#allocation7 + $0xe0] sm:$0xff]
    %v114 = vld [vmem:[#allocation7 + $0xe8] sm:$0xff]
    %v115 = vld [vmem:[#allocation7 + $0xf0] sm:$0xff]
    %v116 = vld [vmem:[#allocation7 + $0xf8] sm:$0xff]
    %v117 = vld [vmem:[%s3] sm:$0x3]
    %v119 = vlaneseq
    %v120 = vshrl.u32 %v119, 7
    %v121 = vsub.s32 0, %v120
    %v122 = vrot.slane %v117, %v121
    %v123 = vlaneseq
    %v124 = vshrl.u32 %v123, 7
    %v125 = vsub.s32 1, %v124
    %v126 = vrot.slane %v117, %v125
    %129 = vmatprep.subr.mxu0 %v86
    %130 = vmatpush1.msra.mxu0 %v85
    %131 = vmatprep.subr.mxu0 %v88
    %132 = vmatpush1.msra.mxu0 %v87
    %133 = vmatprep.subr.mxu0 %v90
    %134 = vmatpush1.msra.mxu0 %v89
    %135 = vmatprep.subr.mxu0 %v92
    %136 = vmatpush1.msra.mxu0 %v91
    %137 = vmatprep.subr.mxu0 %v94
    %138 = vmatpush1.msra.mxu0 %v93
    %139 = vmatprep.subr.mxu0 %v96
    %140 = vmatpush1.msra.mxu0 %v95
    %141 = vmatprep.subr.mxu0 %v98
    %142 = vmatpush1.msra.mxu0 %v97
    %143 = vmatprep.subr.mxu0 %v100
    %144 = vmatpush1.msra.mxu0 %v99
    %145 = vmatprep.subr.mxu0 %v102
    %146 = vmatpush1.msra.mxu0 %v101
    %147 = vmatprep.subr.mxu0 %v104
    %148 = vmatpush1.msra.mxu0 %v103
    %149 = vmatprep.subr.mxu0 %v106
    %150 = vmatpush1.msra.mxu0 %v105
    %151 = vmatprep.subr.mxu0 %v108
    %152 = vmatpush1.msra.mxu0 %v107
    %153 = vmatprep.subr.mxu0 %v110
    %154 = vmatpush1.msra.mxu0 %v109
    %155 = vmatprep.subr.mxu0 %v112
    %156 = vmatpush1.msra.mxu0 %v111
    %157 = vmatprep.subr.mxu0 %v114
    %158 = vmatpush1.msra.mxu0 %v113
    %159 = vmatprep.subr.mxu0 %v116
    %160 = vmatpush1.msra.mxu0 %v115
    %161 = vmatprep.subr.mxu0 0.0
    %162 = vmatpush1.msra.mxu0 0.0
    %163 = vmatprep.subr.mxu0 0.0
    %164 = vmatpush1.msra.mxu0 0.0
    %165 = vmatprep.subr.mxu0 0.0
    %166 = vmatpush1.msra.mxu0 0.0
    %167 = vmatprep.subr.mxu0 0.0
    %168 = vmatpush1.msra.mxu0 0.0
    %169 = vmatprep.subr.mxu0 0.0
    %170 = vmatpush1.msra.mxu0 0.0
    %171 = vmatprep.subr.mxu0 0.0
    %172 = vmatpush1.msra.mxu0 0.0
    %173 = vmatprep.subr.mxu0 0.0
    %174 = vmatpush1.msra.mxu0 0.0
    %175 = vmatprep.subr.mxu0 0.0
    %176 = vmatpush1.msra.mxu0 0.0
    %177 = vmatprep.subr.mxu0 0.0
    %178 = vmatpush1.msra.mxu0 0.0
    %179 = vmatprep.subr.mxu0 0.0
    %180 = vmatpush1.msra.mxu0 0.0
    %181 = vmatprep.subr.mxu0 0.0
    %182 = vmatpush1.msra.mxu0 0.0
    %183 = vmatprep.subr.mxu0 0.0
    %184 = vmatpush1.msra.mxu0 0.0
    %185 = vmatprep.subr.mxu0 0.0
    %186 = vmatpush1.msra.mxu0 0.0
    %187 = vmatprep.subr.mxu0 0.0
    %188 = vmatpush1.msra.mxu0 0.0
    %189 = vmatprep.subr.mxu0 0.0
    %190 = vmatpush1.msra.mxu0 0.0
    %191 = vmatprep.subr.mxu0 0.0
    %192 = vmatpush1.msra.mxu0 0.0
    %193 = vmatprep.mubr.f32.mxu0 0.0
    %194 = vmatmul.mubr.f32.gmra.mrb[0].mxu0 %v69
    %v195 = vpop.f32.mrb[0].mxu0
    %v196 = vadd.f32 %v122, %v195
    %v197 = vpop.f32.mrb[0].mxu0
    %v198 = vadd.f32 %v126, %v197
    %199 = vmatprep.mubr.f32.mxu0 0.0
    %200 = vmatmul.mubr.f32.gmra.mrb[0].mxu0 %v70
    %v201 = vpop.f32.mrb[0].mxu0
    %v202 = vadd.f32 %v122, %v201
    %v203 = vpop.f32.mrb[0].mxu0
    %v204 = vadd.f32 %v126, %v203
    %205 = vmatprep.mubr.f32.mxu0 0.0
    %206 = vmatmul.mubr.f32.gmra.mrb[0].mxu0 %v71
    %v207 = vpop.f32.mrb[0].mxu0
    %v208 = vadd.f32 %v122, %v207
    %v209 = vpop.f32.mrb[0].mxu0
    %v210 = vadd.f32 %v126, %v209
    %211 = vmatprep.mubr.f32.mxu0 0.0
    %212 = vmatmul.mubr.f32.gmra.mrb[0].mxu0 %v72
    %v213 = vpop.f32.mrb[0].mxu0
    %v214 = vadd.f32 %v122, %v213
    %v215 = vpop.f32.mrb[0].mxu0
    %v216 = vadd.f32 %v126, %v215
    %217 = vmatprep.mubr.f32.mxu0 0.0
    %218 = vmatmul.mubr.f32.gmra.mrb[0].mxu0 %v73
    %v219 = vpop.f32.mrb[0].mxu0
    %v220 = vadd.f32 %v122, %v219
    %v221 = vpop.f32.mrb[0].mxu0
    %v222 = vadd.f32 %v126, %v221
    %223 = vmatprep.mubr.f32.mxu0 0.0
    %224 = vmatmul.mubr.f32.gmra.mrb[0].mxu0 %v74
    %v225 = vpop.f32.mrb[0].mxu0
    %v226 = vadd.f32 %v122, %v225
    %v227 = vpop.f32.mrb[0].mxu0
    %v228 = vadd.f32 %v126, %v227
    %229 = vmatprep.mubr.f32.mxu0 0.0
    %230 = vmatmul.mubr.f32.gmra.mrb[0].mxu0 %v75
    %v231 = vpop.f32.mrb[0].mxu0
    %v232 = vadd.f32 %v122, %v231
    %v233 = vpop.f32.mrb[0].mxu0
    %v234 = vadd.f32 %v126, %v233
    %235 = vmatprep.mubr.f32.mxu0 0.0
    %236 = vmatmul.mubr.f32.gmra.mrb[0].mxu0 %v76
    %v237 = vpop.f32.mrb[0].mxu0
    %v238 = vadd.f32 %v122, %v237
    %v239 = vpop.f32.mrb[0].mxu0
    %v240 = vadd.f32 %v126, %v239
    %241 = vmatprep.mubr.f32.mxu0 0.0
    %242 = vmatmul.mubr.f32.gmra.mrb[0].mxu0 %v77
    %v243 = vpop.f32.mrb[0].mxu0
    %v244 = vadd.f32 %v122, %v243
    %v245 = vpop.f32.mrb[0].mxu0
    %v246 = vadd.f32 %v126, %v245
    %247 = vmatprep.mubr.f32.mxu0 0.0
    %248 = vmatmul.mubr.f32.gmra.mrb[0].mxu0 %v78
    %v249 = vpop.f32.mrb[0].mxu0
    %v250 = vadd.f32 %v122, %v249
    %v251 = vpop.f32.mrb[0].mxu0
    %v252 = vadd.f32 %v126, %v251
    %253 = vmatprep.mubr.f32.mxu0 0.0
    %254 = vmatmul.mubr.f32.gmra.mrb[0].mxu0 %v79
    %v255 = vpop.f32.mrb[0].mxu0
    %v256 = vadd.f32 %v122, %v255
    %v257 = vpop.f32.mrb[0].mxu0
    %v258 = vadd.f32 %v126, %v257
    %259 = vmatprep.mubr.f32.mxu0 0.0
    %260 = vmatmul.mubr.f32.gmra.mrb[0].mxu0 %v80
    %v261 = vpop.f32.mrb[0].mxu0
    %v262 = vadd.f32 %v122, %v261
    %v263 = vpop.f32.mrb[0].mxu0
    %v264 = vadd.f32 %v126, %v263
    %265 = vmatprep.mubr.f32.mxu0 0.0
    %266 = vmatmul.mubr.f32.gmra.mrb[0].mxu0 %v81
    %v267 = vpop.f32.mrb[0].mxu0
    %v268 = vadd.f32 %v122, %v267
    %v269 = vpop.f32.mrb[0].mxu0
    %v270 = vadd.f32 %v126, %v269
    %271 = vmatprep.mubr.f32.mxu0 0.0
    %272 = vmatmul.mubr.f32.gmra.mrb[0].mxu0 %v82
    %v273 = vpop.f32.mrb[0].mxu0
    %v274 = vadd.f32 %v122, %v273
    %v275 = vpop.f32.mrb[0].mxu0
    %v276 = vadd.f32 %v126, %v275
    %277 = vmatprep.mubr.f32.mxu0 0.0
    %278 = vmatmul.mubr.f32.gmra.mrb[0].mxu0 %v83
    %v279 = vpop.f32.mrb[0].mxu0
    %v280 = vadd.f32 %v122, %v279
    %v281 = vpop.f32.mrb[0].mxu0
    %v282 = vadd.f32 %v126, %v281
    %283 = vmatprep.mubr.f32.mxu0 0.0
    %284 = vmatmul.mubr.f32.gmra.mrb[0].mxu0 %v84
    %v285 = vpop.f32.mrb[0].mxu0
    %v286 = vadd.f32 %v122, %v285
    %v287 = vpop.f32.mrb[0].mxu0
    %v288 = vadd.f32 %v126, %v287
    %289 = vdwg.mxu0
    %v290 = vpack.c.bf16 %v202, %v196
    %v291 = vpack.c.bf16 %v214, %v208
    %v292 = vpack.c.bf16 %v226, %v220
    %v293 = vpack.c.bf16 %v238, %v232
    %v294 = vpack.c.bf16 %v250, %v244
    %v295 = vpack.c.bf16 %v262, %v256
    %v296 = vpack.c.bf16 %v274, %v268
    %v297 = vpack.c.bf16 %v286, %v280
    %v306 = vunpack.c.l.b16 %v290
    %v307 = vunpack.c.h.b16 %v290
    %v308 = vunpack.c.l.b16 %v291
    %v309 = vunpack.c.h.b16 %v291
    %v310 = vunpack.c.l.b16 %v292
    %v311 = vunpack.c.h.b16 %v292
    %v312 = vunpack.c.l.b16 %v293
    %v313 = vunpack.c.h.b16 %v293
    %v314 = vunpack.c.l.b16 %v294
    %v315 = vunpack.c.h.b16 %v294
    %v316 = vunpack.c.l.b16 %v295
    %v317 = vunpack.c.h.b16 %v295
    %v318 = vunpack.c.l.b16 %v296
    %v319 = vunpack.c.h.b16 %v296
    %v320 = vunpack.c.l.b16 %v297
    %v321 = vunpack.c.h.b16 %v297
    %v322 = vpack.c.b16 %v306, %v306
    %v323 = vpack.c.b16 %v307, %v307
    %v324 = vpack.c.b16 %v308, %v308
    %v325 = vpack.c.b16 %v309, %v309
    %v326 = vpack.c.b16 %v310, %v310
    %v327 = vpack.c.b16 %v311, %v311
    %v328 = vpack.c.b16 %v312, %v312
    %v329 = vpack.c.b16 %v313, %v313
    %v330 = vpack.c.b16 %v314, %v314
    %v331 = vpack.c.b16 %v315, %v315
    %v332 = vpack.c.b16 %v316, %v316
    %v333 = vpack.c.b16 %v317, %v317
    %v334 = vpack.c.b16 %v318, %v318
    %v335 = vpack.c.b16 %v319, %v319
    %v336 = vpack.c.b16 %v320, %v320
    %v337 = vpack.c.b16 %v321, %v321
    %354 = vst [vmem:[#allocation8] sm:$0xf] %v322
    %355 = vst [vmem:[#allocation8 + $0x4] sm:$0xf] %v323
    %356 = vst [vmem:[#allocation8 + $0x8] sm:$0xf] %v324
    %357 = vst [vmem:[#allocation8 + $0xc] sm:$0xf] %v325
    %358 = vst [vmem:[#allocation8 + $0x10] sm:$0xf] %v326
    %359 = vst [vmem:[#allocation8 + $0x14] sm:$0xf] %v327
    %360 = vst [vmem:[#allocation8 + $0x18] sm:$0xf] %v328
    %361 = vst [vmem:[#allocation8 + $0x1c] sm:$0xf] %v329
    %362 = vst [vmem:[#allocation8 + $0x20] sm:$0xf] %v330
    %363 = vst [vmem:[#allocation8 + $0x24] sm:$0xf] %v331
    %364 = vst [vmem:[#allocation8 + $0x28] sm:$0xf] %v332
    %365 = vst [vmem:[#allocation8 + $0x2c] sm:$0xf] %v333
    %366 = vst [vmem:[#allocation8 + $0x30] sm:$0xf] %v334
    %367 = vst [vmem:[#allocation8 + $0x34] sm:$0xf] %v335
    %368 = vst [vmem:[#allocation8 + $0x38] sm:$0xf] %v336
    %369 = vst [vmem:[#allocation8 + $0x3c] sm:$0xf] %v337
    %370 = vst [vmem:[#allocation11] sm:$0xff] %v198
    %371 = vst [vmem:[#allocation11 + $0x8] sm:$0xff] %v204
    %372 = vst [vmem:[#allocation11 + $0x10] sm:$0xff] %v210
    %373 = vst [vmem:[#allocation11 + $0x18] sm:$0xff] %v216
    %374 = vst [vmem:[#allocation11 + $0x20] sm:$0xff] %v222
    %375 = vst [vmem:[#allocation11 + $0x28] sm:$0xff] %v228
    %376 = vst [vmem:[#allocation11 + $0x30] sm:$0xff] %v234
    %377 = vst [vmem:[#allocation11 + $0x38] sm:$0xff] %v240
    %378 = vst [vmem:[#allocation11 + $0x40] sm:$0xff] %v246
    %379 = vst [vmem:[#allocation11 + $0x48] sm:$0xff] %v252
    %380 = vst [vmem:[#allocation11 + $0x50] sm:$0xff] %v258
    %381 = vst [vmem:[#allocation11 + $0x58] sm:$0xff] %v264
    %382 = vst [vmem:[#allocation11 + $0x60] sm:$0xff] %v270
    %383 = vst [vmem:[#allocation11 + $0x68] sm:$0xff] %v276
    %384 = vst [vmem:[#allocation11 + $0x70] sm:$0xff] %v282
    %385 = vst [vmem:[#allocation11 + $0x78] sm:$0xff] %v288
    %v386 = vld [vmem:[%s4] sm:$0xff]
    %v387 = vld [vmem:[#allocation5] sm:$0xff]
    %v388 = vld [vmem:[#allocation5 + $0x8] sm:$0xff]
    %v389 = vld [vmem:[#allocation5 + $0x10] sm:$0xff]
    %v390 = vld [vmem:[#allocation5 + $0x18] sm:$0xff]
    %v391 = vld [vmem:[#allocation5 + $0x20] sm:$0xff]
    %v392 = vld [vmem:[#allocation5 + $0x28] sm:$0xff]
    %v393 = vld [vmem:[#allocation5 + $0x30] sm:$0xff]
    %v394 = vld [vmem:[#allocation5 + $0x38] sm:$0xff]
    %v395 = vld [vmem:[#allocation5 + $0x40] sm:$0xff]
    %v396 = vld [vmem:[#allocation5 + $0x48] sm:$0xff]
    %v397 = vld [vmem:[#allocation5 + $0x50] sm:$0xff]
    %v398 = vld [vmem:[#allocation5 + $0x58] sm:$0xff]
    %v399 = vld [vmem:[#allocation5 + $0x60] sm:$0xff]
    %v400 = vld [vmem:[#allocation5 + $0x68] sm:$0xff]
    %v401 = vld [vmem:[#allocation5 + $0x70] sm:$0xff]
    %v402 = vld [vmem:[#allocation5 + $0x78] sm:$0xff]
    %v403 = vld [vmem:[%s5] sm:$0xff]
    %405 = vset.pattern.permute.xlu0 0
    %406 = vperm.xlu0 %405, %v403
    %v407 = vpop.permute.xlu0 %406
    %409 = vmatprep.subr.mxu0 0.0
    %410 = vmatpush1.msra.mxu0 %v387
    %411 = vmatprep.subr.mxu0 0.0
    %412 = vmatpush1.msra.mxu0 %v388
    %413 = vmatprep.subr.mxu0 0.0
    %414 = vmatpush1.msra.mxu0 %v389
    %415 = vmatprep.subr.mxu0 0.0
    %416 = vmatpush1.msra.mxu0 %v390
    %417 = vmatprep.subr.mxu0 0.0
    %418 = vmatpush1.msra.mxu0 %v391
    %419 = vmatprep.subr.mxu0 0.0
    %420 = vmatpush1.msra.mxu0 %v392
    %421 = vmatprep.subr.mxu0 0.0
    %422 = vmatpush1.msra.mxu0 %v393
    %423 = vmatprep.subr.mxu0 0.0
    %424 = vmatpush1.msra.mxu0 %v394
    %425 = vmatprep.subr.mxu0 0.0
    %426 = vmatpush1.msra.mxu0 %v395
    %427 = vmatprep.subr.mxu0 0.0
    %428 = vmatpush1.msra.mxu0 %v396
    %429 = vmatprep.subr.mxu0 0.0
    %430 = vmatpush1.msra.mxu0 %v397
    %431 = vmatprep.subr.mxu0 0.0
    %432 = vmatpush1.msra.mxu0 %v398
    %433 = vmatprep.subr.mxu0 0.0
    %434 = vmatpush1.msra.mxu0 %v399
    %435 = vmatprep.subr.mxu0 0.0
    %436 = vmatpush1.msra.mxu0 %v400
    %437 = vmatprep.subr.mxu0 0.0
    %438 = vmatpush1.msra.mxu0 %v401
    %439 = vmatprep.subr.mxu0 0.0
    %440 = vmatpush1.msra.mxu0 %v402
    %441 = vmatprep.subr.mxu0 0.0
    %442 = vmatpush1.msra.mxu0 0.0
    %443 = vmatprep.subr.mxu0 0.0
    %444 = vmatpush1.msra.mxu0 0.0
    %445 = vmatprep.subr.mxu0 0.0
    %446 = vmatpush1.msra.mxu0 0.0
    %447 = vmatprep.subr.mxu0 0.0
    %448 = vmatpush1.msra.mxu0 0.0
    %449 = vmatprep.subr.mxu0 0.0
    %450 = vmatpush1.msra.mxu0 0.0
    %451 = vmatprep.subr.mxu0 0.0
    %452 = vmatpush1.msra.mxu0 0.0
    %453 = vmatprep.subr.mxu0 0.0
    %454 = vmatpush1.msra.mxu0 0.0
    %455 = vmatprep.subr.mxu0 0.0
    %456 = vmatpush1.msra.mxu0 0.0
    %457 = vmatprep.subr.mxu0 0.0
    %458 = vmatpush1.msra.mxu0 0.0
    %459 = vmatprep.subr.mxu0 0.0
    %460 = vmatpush1.msra.mxu0 0.0
    %461 = vmatprep.subr.mxu0 0.0
    %462 = vmatpush1.msra.mxu0 0.0
    %463 = vmatprep.subr.mxu0 0.0
    %464 = vmatpush1.msra.mxu0 0.0
    %465 = vmatprep.subr.mxu0 0.0
    %466 = vmatpush1.msra.mxu0 0.0
    %467 = vmatprep.subr.mxu0 0.0
    %468 = vmatpush1.msra.mxu0 0.0
    %469 = vmatprep.subr.mxu0 0.0
    %470 = vmatpush1.msra.mxu0 0.0
    %471 = vmatprep.subr.mxu0 0.0
    %472 = vmatpush1.msra.mxu0 0.0
    %473 = vmatprep.mubr.f32.mxu0 0.0
    %474 = vmatmul.mubr.f32.gmra.mrb[0].mxu0 %v386
    %v475 = vpop.f32.mrb[0].mxu0
    %v476 = vadd.f32 %v407, %v475
    %v477 = vpop.f32.mrb[0].mxu0
    %478 = vdwg.mxu0
    %479 = vst [vmem:[#allocation9] sm:$0xff] %v476
    // Predicated region
    $region38: #{tpu_custom_call.1} parent=1 // pred_check
      _
    $region39: #{tpu_custom_call.1} parent=1 // pred_check_branch
      %481 = sbr.rel (0) target = $region41
    $region40: #{tpu_custom_call.1} parent=1 // pred_region
      %s483 = ssub.s32 1024, 1024
      %484 = vsyncadd [#allocation4], %s483
      %s485 = sshll.u32 [#allocation8], 4
      %s486 = int_to_ptr.vmem [resolvable:$true] %s485
      %491 = dma.vmem_to_hbm [thread:$0]  %s486, 1024, %s6, [#allocation4], 64, 64, 4
    $region41: #{tpu_custom_call.1} parent=1 // pred_fallthru
      _
    // Predicated region
    $region42: #{tpu_custom_call.1} parent=1 // pred_check
      _
    $region43: #{tpu_custom_call.1} parent=1 // pred_check_branch
      %493 = sbr.rel (0) target = $region45
    $region44: #{tpu_custom_call.1} parent=1 // pred_region
      %s495 = ssub.s32 128, 128
      %496 = vsyncadd [#allocation10], %s495
      %s498 = sshll.u32 [#allocation9], 4
      %s499 = int_to_ptr.vmem [resolvable:$true] %s498
      %501 = dma.vmem_to_hbm [thread:$0]  %s499, 128, %s7, [#allocation10]
    $region45: #{tpu_custom_call.1} parent=1 // pred_fallthru
      _
    // Predicated region
    $region46: #{tpu_custom_call.1} parent=1 // pred_check
      _
    $region47: #{tpu_custom_call.1} parent=1 // pred_check_branch
      %503 = sbr.rel (0) target = $region49
    $region48: #{tpu_custom_call.1} parent=1 // pred_region
      %s505 = ssub.s32 2048, 2048
      %506 = vsyncadd [#allocation10], %s505
      %s507 = sshll.u32 [#allocation11], 4
      %s508 = int_to_ptr.vmem [resolvable:$true] %s507
      %513 = dma.vmem_to_hbm [thread:$0]  %s508, 2048, %s8, [#allocation10], 128, 128, 8
    $region49: #{tpu_custom_call.1} parent=1 // pred_fallthru
      _
    // Predicated region
    $region50: #{tpu_custom_call.1} parent=1 // pred_check
      _
    $region51: #{tpu_custom_call.1} parent=1 // pred_check_branch
      %515 = sbr.rel (0) target = $region53
    $region52: #{tpu_custom_call.1} parent=1 // pred_region
      %516 = dma.done [#allocation4], 1024
    $region53: #{tpu_custom_call.1} parent=1 // pred_fallthru
      _
    // Predicated region
    $region54: #{tpu_custom_call.1} parent=1 // pred_check
      _
    $region55: #{tpu_custom_call.1} parent=1 // pred_check_branch
      %518 = sbr.rel (0) target = $region57
    $region56: #{tpu_custom_call.1} parent=1 // pred_region
      %519 = dma.done [#allocation10], 128
    $region57: #{tpu_custom_call.1} parent=1 // pred_fallthru
      _
    // Predicated region
    $region58: #{tpu_custom_call.1} parent=1 // pred_check
      _
    $region59: #{tpu_custom_call.1} parent=1 // pred_check_branch
      %521 = sbr.rel (0) target = $region61
    $region60: #{tpu_custom_call.1} parent=1 // pred_region
      %522 = dma.done [#allocation10], 2048
    $region61: #{tpu_custom_call.1} parent=1 // pred_fallthru
      _
    %523 = vsyncpa [#allocation3], 1
    %524 = vsyncpa [#allocation6], 1
    %525 = vsyncpa [#allocation4], 1
    %526 = vsyncpa [#allocation10], 1

</llo_original>
